<compile_context>
chip_gen: v7x
topology: tpu7x:2x2x1
jax: 0.10.0
libtpu: 0.0.40
codegen_flags: <defaults>
</compile_context>

<pallas_src>
import functools

import jax
import jax.numpy as jnp
from jax import lax
from jax.experimental import pallas as pl
from jax.experimental.pallas import tpu as pltpu


def _round_up(x, m):
    return ((x + m - 1) // m) * m


# --------------------------------------------------------------------------------------
# Kernels
# --------------------------------------------------------------------------------------
def _self_output_kernel(x_ref, res_ref, w_ref, p_ref, o_ref, *, eps):
    """Resident-weight path: one grid axis over row tiles, full (H, H) weight in VMEM."""
    # dense: native-dtype operands, f32 accumulation on the MXU
    y = jnp.dot(x_ref[...], w_ref[...], preferred_element_type=jnp.float32)

    p = p_ref[...].astype(jnp.float32)                       # (3, H): bias / gamma / beta
    h = y + p[0:1, :] + res_ref[...].astype(jnp.float32)     # dropout(eval) = identity

    # LayerNorm over the hidden dim, elementwise affine, f32 math
    mean = jnp.mean(h, axis=-1, keepdims=True)
    c = h - mean
    var = jnp.mean(c * c, axis=-1, keepdims=True)
    inv = lax.rsqrt(var + eps)
    o_ref[...] = (c * inv * p[1:2, :] + p[2:3, :]).astype(o_ref.dtype)


def _self_output_ktiled_kernel(x_ref, res_ref, w_ref, p_ref, o_ref, acc_ref, *, eps):
    """K-tiled path for large H: weight streamed as (tk, H) slabs, f32 accumulator scratch."""
    k = pl.program_id(1)

    @pl.when(k == 0)
    def _():
        acc_ref[...] = jnp.zeros_like(acc_ref)

    acc_ref[...] += jnp.dot(x_ref[...], w_ref[...], preferred_element_type=jnp.float32)

    @pl.when(k == pl.num_programs(1) - 1)
    def _():
        p = p_ref[...].astype(jnp.float32)
        h = acc_ref[...] + p[0:1, :] + res_ref[...].astype(jnp.float32)
        mean = jnp.mean(h, axis=-1, keepdims=True)
        c = h - mean
        var = jnp.mean(c * c, axis=-1, keepdims=True)
        inv = lax.rsqrt(var + eps)
        o_ref[...] = (c * inv * p[1:2, :] + p[2:3, :]).astype(o_ref.dtype)


# --------------------------------------------------------------------------------------
# Wrapper
# --------------------------------------------------------------------------------------
def self_output(hidden_state, residual, w_t, bias, gamma, beta, *, eps=1e-12,
                tm=None, tk=None, force_k_tiling=False):
    """hidden_state, residual: (B, S, H). w_t: (H_in, H_out) = PyTorch weight.T."""
    B, S, H = hidden_state.shape
    M = B * S
    dtype = hidden_state.dtype
    itemsize = jnp.dtype(dtype).itemsize
    w_itemsize = jnp.dtype(w_t.dtype).itemsize
    sublane = {4: 8, 2: 16, 1: 32}.get(itemsize, 8)
    w_bytes = H * H * w_itemsize

    # ---- generation-aware VMEM budget --------------------------------------------------
    vmem_cap = 64 * 1024 * 1024                     # conservative fallback (v7x per-TC VMEM)
    try:
        vmem_cap = int(pltpu.get_tpu_info().vmem_capacity_bytes)
    except Exception:
        pass
    budget = int(vmem_cap * 0.85)                   # leave headroom for Mosaic internal scratch

    # ---- path selection: resident weight vs K-tiled streaming --------------------------
    # Resident needs (worst case, unbuffered fallback) 2x weight + the smallest activation tiles.
    use_k = bool(force_k_tiling)
    if not use_k:
        min_resident = 2 * w_bytes + (2 * 3 * itemsize + 3 * 4) * 64 * H + 12 * H
        if min_resident > budget and H % 128 == 0:
            use_k = True

    # ---- row tile -----------------------------------------------------------------------
    if tm is None:
        w_term = (2 * 128 * H * w_itemsize) if use_k else (2 * w_bytes)
        tm = 64
        for cand in (1024, 512, 256, 128, 64):
            est = w_term + (2 * 3 * itemsize + 3 * 4) * cand * H + 12 * H
            if est <= budget:
                tm = cand
                break
    tm = min(tm, _round_up(M, sublane))
    tm = max(sublane, _round_up(tm, sublane))
    # Keep >= 2 row-grid steps so a 2-TC chip (v7x) can shard the 'parallel' axis.
    while pl.cdiv(M, tm) < 2 and tm > sublane:
        tm = max(sublane, _round_up(tm // 2, sublane))
    grid_m = pl.cdiv(M, tm)

    # ---- K tile -------------------------------------------------------------------------
    if use_k:
        if tk is None:
            for cand in (512, 256, 128):
                if H % cand != 0:
                    continue
                est = (2 * cand * H * w_itemsize + 2 * tm * cand * itemsize
                       + 4 * tm * H * itemsize + tm * H * 4 + 12 * H)
                if est <= budget:
                    tk = cand
                    break
        if tk is None or H % tk != 0 or tk % 128 != 0:
            # TODO(synk): H not a multiple of 128 -> no clean K-tiling; fall back to resident
            # weight (may exceed the VMEM budget for very large, odd H).
            use_k = False
            tk = None

    # ---- small params folded into one (3, H) f32 block ----------------------------------
    params = jnp.stack([bias.astype(jnp.float32).reshape(H),
                        gamma.astype(jnp.float32).reshape(H),
                        beta.astype(jnp.float32).reshape(H)], axis=0)

    x2 = hidden_state.reshape(M, H)
    r2 = residual.reshape(M, H)

    cost = pl.CostEstimate(
        flops=2 * M * H * H,
        transcendentals=M,                                    # one rsqrt per row
        bytes_accessed=(3 * M * H) * itemsize + w_bytes + 3 * H * 4,
    )

    def _vmem_limit(est):
        return int(min(budget, max(int(est * 1.25) + (2 << 20), 32 << 20)))

    if use_k:
        est = (2 * tk * H * w_itemsize + 2 * tm * tk * itemsize
               + 4 * tm * H * itemsize + tm * H * 4 + 12 * H)
        call = pl.pallas_call(
            functools.partial(_self_output_ktiled_kernel, eps=eps),
            out_shape=jax.ShapeDtypeStruct((M, H), dtype),
            grid_spec=pltpu.PrefetchScalarGridSpec(
                num_scalar_prefetch=0,
                grid=(grid_m, H // tk),
                in_specs=[
                    pl.BlockSpec((tm, tk), lambda i, k: (i, k)),   # x tile
                    pl.BlockSpec((tm, H), lambda i, k: (i, 0)),    # residual (epilogue only)
                    pl.BlockSpec((tk, H), lambda i, k: (k, 0)),    # streamed weight slab
                    pl.BlockSpec((3, H), lambda i, k: (0, 0)),     # bias / gamma / beta
                ],
                out_specs=pl.BlockSpec((tm, H), lambda i, k: (i, 0)),
                scratch_shapes=[pltpu.VMEM((tm, H), jnp.float32)],
            ),
            compiler_params=pltpu.CompilerParams(
                dimension_semantics=("parallel", "arbitrary"),
                vmem_limit_bytes=_vmem_limit(est),
            ),
            cost_estimate=cost,
        )
        out = call(x2, r2, w_t, params)
    else:
        est = 2 * w_bytes + (2 * 3 * itemsize + 3 * 4) * tm * H + 12 * H

        def _build(buffered_weight):
            if buffered_weight:
                # Constant index_map -> fetched once; single buffer halves weight VMEM.
                w_spec = pl.BlockSpec((H, H), lambda i: (0, 0),
                                      pipeline_mode=pl.Buffered(1))
            else:
                w_spec = pl.BlockSpec((H, H), lambda i: (0, 0))
            return pl.pallas_call(
                functools.partial(_self_output_kernel, eps=eps),
                out_shape=jax.ShapeDtypeStruct((M, H), dtype),
                grid_spec=pltpu.PrefetchScalarGridSpec(
                    num_scalar_prefetch=0,
                    grid=(grid_m,),
                    in_specs=[
                        pl.BlockSpec((tm, H), lambda i: (i, 0)),    # x tile
                        pl.BlockSpec((tm, H), lambda i: (i, 0)),    # residual tile
                        w_spec,                                     # resident weight
                        pl.BlockSpec((3, H), lambda i: (0, 0)),     # bias / gamma / beta
                    ],
                    out_specs=pl.BlockSpec((tm, H), lambda i: (i, 0)),
                ),
                compiler_params=pltpu.CompilerParams(
                    dimension_semantics=("parallel",),
                    vmem_limit_bytes=_vmem_limit(est),
                ),
                cost_estimate=cost,
            )

        try:
            out = _build(buffered_weight=True)(x2, r2, w_t, params)
        except Exception:
            # Fallback for jax versions that reject pipeline_mode=pl.Buffered(1).
            out = _build(buffered_weight=False)(x2, r2, w_t, params)

    return out.reshape(B, S, H)


# --------------------------------------------------------------------------------------
# Pure-JAX reference
# --------------------------------------------------------------------------------------
def reference(hidden_state, residual, w_t, bias, gamma, beta, eps=1e-12):
    h = hidden_state.astype(jnp.float32) @ w_t.astype(jnp.float32) + bias.astype(jnp.float32)
    h = h + residual.astype(jnp.float32)
    mean = jnp.mean(h, axis=-1, keepdims=True)
    var = jnp.mean((h - mean) ** 2, axis=-1, keepdims=True)
    out = (h - mean) / jnp.sqrt(var + eps) * gamma.astype(jnp.float32) + beta.astype(jnp.float32)
    return out.astype(hidden_state.dtype)


if __name__ == "__main__":
    eps = 1e-12
    key = jax.random.PRNGKey(0)

    def make_inputs(k, B, S, H, dtype=jnp.float32):
        k1, k2, k3, k4 = jax.random.split(k, 4)
        hs = jax.random.normal(k1, (B, S, H), dtype=jnp.float32).astype(dtype)
        res = jax.random.normal(k2, (B, S, H), dtype=jnp.float32).astype(dtype)
        # nn.Linear(H, H): weight (H_out, H_in), bias (H,) -> pass weight.T to the kernel
        w = (jax.random.normal(k3, (H, H), dtype=jnp.float32) / jnp.sqrt(H)).astype(dtype)
        b = (jax.random.normal(k4, (H,), dtype=jnp.float32) * 0.01).astype(dtype)
        gamma = jnp.ones((H,), dtype=jnp.float32)
        beta = jnp.zeros((H,), dtype=jnp.float32)
        return hs, res, w.T, b, gamma, beta

    ks = jax.random.split(key, 4)

    # 1) Small shape matching the module spec (batch=2, seq=8, hidden=32), f32.
    hs, res, w_t, b, g, be = make_inputs(ks[0], 2, 8, 32)
    out = jax.block_until_ready(self_output(hs, res, w_t, b, g, be, eps=eps))
    ref = reference(hs, res, w_t, b, g, be, eps=eps)
    assert out.shape == (2, 8, 32)
    assert jnp.allclose(out, ref, atol=1e-4, rtol=1e-4), "mismatch vs reference (small f32)"

    # 2) Same small shape in bf16 -> exercises the native-dtype MXU path.
    hs, res, w_t, b, g, be = make_inputs(ks[1], 2, 8, 32, dtype=jnp.bfloat16)
    out_bf = jax.block_until_ready(self_output(hs, res, w_t, b, g, be, eps=eps))
    ref_bf = reference(hs, res, w_t, b, g, be, eps=eps)
    assert out_bf.dtype == jnp.bfloat16
    assert jnp.allclose(out_bf.astype(jnp.float32), ref_bf.astype(jnp.float32),
                        atol=3e-2, rtol=3e-2), "mismatch vs reference (small bf16)"

    # 3) Multi-step row grid with a ragged last block (no wrapper padding / slicing).
    hs, res, w_t, b, g, be = make_inputs(ks[2], 2, 260, 128)   # M = 520 -> ragged last tile
    out2 = jax.block_until_ready(self_output(hs, res, w_t, b, g, be, eps=eps))
    ref2 = reference(hs, res, w_t, b, g, be, eps=eps)
    assert out2.shape == (2, 260, 128)
    assert jnp.allclose(out2, ref2, atol=1e-4, rtol=1e-4), "mismatch vs reference (ragged grid)"

    # 4) Force the K-tiled (streamed weight + f32 accumulator) path used for large H.
    hs, res, w_t, b, g, be = make_inputs(ks[3], 2, 192, 256)   # M = 384, K grid = 2
    out3 = jax.block_until_ready(
        self_output(hs, res, w_t, b, g, be, eps=eps, force_k_tiling=True, tk=128))
    ref3 = reference(hs, res, w_t, b, g, be, eps=eps)
    assert out3.shape == (2, 192, 256)
    assert jnp.allclose(out3, ref3, atol=1e-3, rtol=1e-3), "mismatch vs reference (K-tiled)"

    print("KERNEL_OK")
</pallas_src>

<mosaic_0001>
module attributes {stable_mosaic.version = 11 : i64} {
  func.func @_self_output_kernel(%arg0: i32, %arg1: memref<8x32xf32, #tpu.memory_space<vmem>>, %arg2: memref<8x32xf32, #tpu.memory_space<vmem>>, %arg3: memref<32x32xf32, #tpu.memory_space<vmem>>, %arg4: memref<3x32xf32, #tpu.memory_space<vmem>>, %arg5: memref<8x32xf32, #tpu.memory_space<vmem>>) attributes {dimension_semantics = [#tpu.dimension_semantics<parallel>], iteration_bounds = array<i64: 2>, scalar_prefetch = 0 : i64, scratch_operands = 0 : i64, tpu.core_type = #tpu.core_type<tc>, window_params = [{transform_indices = @transform_0, window_bounds = array<i64: 8, 32>}, {transform_indices = @transform_1, window_bounds = array<i64: 8, 32>}, {pipeline_mode = #tpu.pipeline_mode<synchronous>, transform_indices = @transform_2, window_bounds = array<i64: 32, 32>}, {pipeline_mode = #tpu.pipeline_mode<synchronous>, transform_indices = @transform_3, window_bounds = array<i64: 3, 32>}, {transform_indices = @transform_4, window_bounds = array<i64: 8, 32>}]} {
    %c0 = arith.constant 0 : index
    %c0_0 = arith.constant 0 : index
    %0 = vector.load %arg1[%c0, %c0_0] : memref<8x32xf32, #tpu.memory_space<vmem>>, vector<8x32xf32>
    %c0_1 = arith.constant 0 : index
    %c0_2 = arith.constant 0 : index
    %1 = vector.load %arg3[%c0_1, %c0_2] : memref<32x32xf32, #tpu.memory_space<vmem>>, vector<32x32xf32>
    %cst = arith.constant dense<0.000000e+00> : vector<8x32xf32>
    %2 = tpu.matmul %0, %1, %cst {dimension_numbers = #tpu.dot_dimension_numbers<[1], [0], [0], [1], [0, 0, 1, 1], [], []>} : vector<8x32xf32>, vector<32x32xf32>, vector<8x32xf32> -> vector<8x32xf32>
    %c0_3 = arith.constant 0 : index
    %c0_4 = arith.constant 0 : index
    %3 = vector.load %arg4[%c0_3, %c0_4] : memref<3x32xf32, #tpu.memory_space<vmem>>, vector<3x32xf32>
    %4 = vector.extract_strided_slice %3 {offsets = [0, 0], sizes = [1, 32], strides = [1, 1]} : vector<3x32xf32> to vector<1x32xf32>
    %5 = vector.broadcast %4 : vector<1x32xf32> to vector<8x32xf32>
    %6 = arith.addf %2, %5 : vector<8x32xf32>
    %c0_5 = arith.constant 0 : index
    %c0_6 = arith.constant 0 : index
    %7 = vector.load %arg2[%c0_5, %c0_6] : memref<8x32xf32, #tpu.memory_space<vmem>>, vector<8x32xf32>
    %8 = arith.addf %6, %7 : vector<8x32xf32>
    %cst_7 = arith.constant dense<0.000000e+00> : vector<8xf32>
    %9 = vector.multi_reduction <add>, %8, %cst_7 [1] : vector<8x32xf32> to vector<8xf32>
    %10 = vector.shape_cast %9 : vector<8xf32> to vector<8x1xf32>
    %cst_8 = arith.constant 3.200000e+01 : f32
    %11 = vector.broadcast %cst_8 : f32 to vector<8x1xf32>
    %12 = arith.divf %10, %11 : vector<8x1xf32>
    %13 = vector.broadcast %12 : vector<8x1xf32> to vector<8x32xf32>
    %14 = arith.subf %8, %13 : vector<8x32xf32>
    %15 = arith.mulf %14, %14 : vector<8x32xf32>
    %cst_9 = arith.constant dense<0.000000e+00> : vector<8xf32>
    %16 = vector.multi_reduction <add>, %15, %cst_9 [1] : vector<8x32xf32> to vector<8xf32>
    %17 = vector.shape_cast %16 : vector<8xf32> to vector<8x1xf32>
    %cst_10 = arith.constant 3.200000e+01 : f32
    %18 = vector.broadcast %cst_10 : f32 to vector<8x1xf32>
    %19 = arith.divf %17, %18 : vector<8x1xf32>
    %cst_11 = arith.constant 9.99999996E-13 : f32
    %20 = vector.broadcast %cst_11 : f32 to vector<8x1xf32>
    %21 = arith.addf %19, %20 : vector<8x1xf32>
    %22 = math.rsqrt %21 : vector<8x1xf32>
    %23 = vector.broadcast %22 : vector<8x1xf32> to vector<8x32xf32>
    %24 = arith.mulf %14, %23 : vector<8x32xf32>
    %25 = vector.extract_strided_slice %3 {offsets = [1, 0], sizes = [1, 32], strides = [1, 1]} : vector<3x32xf32> to vector<1x32xf32>
    %26 = vector.broadcast %25 : vector<1x32xf32> to vector<8x32xf32>
    %27 = arith.mulf %24, %26 : vector<8x32xf32>
    %28 = vector.extract_strided_slice %3 {offsets = [2, 0], sizes = [1, 32], strides = [1, 1]} : vector<3x32xf32> to vector<1x32xf32>
    %29 = vector.broadcast %28 : vector<1x32xf32> to vector<8x32xf32>
    %30 = arith.addf %27, %29 : vector<8x32xf32>
    %c0_12 = arith.constant 0 : index
    %c0_13 = arith.constant 0 : index
    %31 = vector.load %arg5[%c0_12, %c0_13] : memref<8x32xf32, #tpu.memory_space<vmem>>, vector<8x32xf32>
    tpu.vector_store %arg5[%c0_12, %c0_13], %30 {strides = array<i32>} : memref<8x32xf32, #tpu.memory_space<vmem>>, vector<8x32xf32>,
    return
  }
  func.func @transform_0(%arg0: i32) -> (i32, i32) {
    %c0_i32 = arith.constant 0 : i32
    %c0_i32_0 = arith.constant 0 : i32
    return %arg0, %c0_i32 : i32, i32
  }
  func.func @transform_1(%arg0: i32) -> (i32, i32) {
    %c0_i32 = arith.constant 0 : i32
    %c0_i32_0 = arith.constant 0 : i32
    return %arg0, %c0_i32 : i32, i32
  }
  func.func @transform_2(%arg0: i32) -> (i32, i32) {
    %c0_i32 = arith.constant 0 : i32
    %c0_i32_0 = arith.constant 0 : i32
    %c0_i32_1 = arith.constant 0 : i32
    return %c0_i32, %c0_i32_0 : i32, i32
  }
  func.func @transform_3(%arg0: i32) -> (i32, i32) {
    %c0_i32 = arith.constant 0 : i32
    %c0_i32_0 = arith.constant 0 : i32
    %c0_i32_1 = arith.constant 0 : i32
    return %c0_i32, %c0_i32_0 : i32, i32
  }
  func.func @transform_4(%arg0: i32) -> (i32, i32) {
    %c0_i32 = arith.constant 0 : i32
    %c0_i32_0 = arith.constant 0 : i32
    return %arg0, %c0_i32 : i32, i32
  }
}

module attributes {stable_mosaic.version = 11 : i64} {
  func.func @_self_output_kernel(%arg0: i32, %arg1: memref<8x32xf32, #tpu.memory_space<vmem>>, %arg2: memref<8x32xf32, #tpu.memory_space<vmem>>, %arg3: memref<32x32xf32, #tpu.memory_space<vmem>>, %arg4: memref<3x32xf32, #tpu.memory_space<vmem>>, %arg5: memref<8x32xf32, #tpu.memory_space<vmem>>) attributes {dimension_semantics = [#tpu.dimension_semantics<parallel>], iteration_bounds = array<i64: 2>, scalar_prefetch = 0 : i64, scratch_operands = 0 : i64, tpu.core_type = #tpu.core_type<tc>, window_params = [{transform_indices = @transform_0, window_bounds = array<i64: 8, 32>}, {transform_indices = @transform_1, window_bounds = array<i64: 8, 32>}, {pipeline_mode = #tpu.pipeline_mode<synchronous>, transform_indices = @transform_2, window_bounds = array<i64: 32, 32>}, {pipeline_mode = #tpu.pipeline_mode<synchronous>, transform_indices = @transform_3, window_bounds = array<i64: 3, 32>}, {transform_indices = @transform_4, window_bounds = array<i64: 8, 32>}]} {
    %c0 = arith.constant 0 : index
    %c0_0 = arith.constant 0 : index
    %0 = vector.load %arg1[%c0, %c0_0] : memref<8x32xf32, #tpu.memory_space<vmem>>, vector<8x32xf32>
    %c0_1 = arith.constant 0 : index
    %c0_2 = arith.constant 0 : index
    %1 = vector.load %arg3[%c0_1, %c0_2] : memref<32x32xf32, #tpu.memory_space<vmem>>, vector<32x32xf32>
    %cst = arith.constant dense<0.000000e+00> : vector<8x32xf32>
    %2 = tpu.matmul %0, %1, %cst {dimension_numbers = #tpu.dot_dimension_numbers<[1], [0], [0], [1], [0, 0, 1, 1], [], []>} : vector<8x32xf32>, vector<32x32xf32>, vector<8x32xf32> -> vector<8x32xf32>
    %c0_3 = arith.constant 0 : index
    %c0_4 = arith.constant 0 : index
    %3 = vector.load %arg4[%c0_3, %c0_4] : memref<3x32xf32, #tpu.memory_space<vmem>>, vector<3x32xf32>
    %4 = vector.extract_strided_slice %3 {offsets = [0, 0], sizes = [1, 32], strides = [1, 1]} : vector<3x32xf32> to vector<1x32xf32>
    %5 = vector.broadcast %4 : vector<1x32xf32> to vector<8x32xf32>
    %6 = arith.addf %2, %5 : vector<8x32xf32>
    %c0_5 = arith.constant 0 : index
    %c0_6 = arith.constant 0 : index
    %7 = vector.load %arg2[%c0_5, %c0_6] : memref<8x32xf32, #tpu.memory_space<vmem>>, vector<8x32xf32>
    %8 = arith.addf %6, %7 : vector<8x32xf32>
    %cst_7 = arith.constant dense<0.000000e+00> : vector<8xf32>
    %9 = vector.multi_reduction <add>, %8, %cst_7 [1] : vector<8x32xf32> to vector<8xf32>
    %10 = vector.shape_cast %9 : vector<8xf32> to vector<8x1xf32>
    %cst_8 = arith.constant 3.200000e+01 : f32
    %11 = vector.broadcast %cst_8 : f32 to vector<8x1xf32>
    %12 = arith.divf %10, %11 : vector<8x1xf32>
    %13 = vector.broadcast %12 : vector<8x1xf32> to vector<8x32xf32>
    %14 = arith.subf %8, %13 : vector<8x32xf32>
    %15 = arith.mulf %14, %14 : vector<8x32xf32>
    %cst_9 = arith.constant dense<0.000000e+00> : vector<8xf32>
    %16 = vector.multi_reduction <add>, %15, %cst_9 [1] : vector<8x32xf32> to vector<8xf32>
    %17 = vector.shape_cast %16 : vector<8xf32> to vector<8x1xf32>
    %cst_10 = arith.constant 3.200000e+01 : f32
    %18 = vector.broadcast %cst_10 : f32 to vector<8x1xf32>
    %19 = arith.divf %17, %18 : vector<8x1xf32>
    %cst_11 = arith.constant 9.99999996E-13 : f32
    %20 = vector.broadcast %cst_11 : f32 to vector<8x1xf32>
    %21 = arith.addf %19, %20 : vector<8x1xf32>
    %22 = math.rsqrt %21 : vector<8x1xf32>
    %23 = vector.broadcast %22 : vector<8x1xf32> to vector<8x32xf32>
    %24 = arith.mulf %14, %23 : vector<8x32xf32>
    %25 = vector.extract_strided_slice %3 {offsets = [1, 0], sizes = [1, 32], strides = [1, 1]} : vector<3x32xf32> to vector<1x32xf32>
    %26 = vector.broadcast %25 : vector<1x32xf32> to vector<8x32xf32>
    %27 = arith.mulf %24, %26 : vector<8x32xf32>
    %28 = vector.extract_strided_slice %3 {offsets = [2, 0], sizes = [1, 32], strides = [1, 1]} : vector<3x32xf32> to vector<1x32xf32>
    %29 = vector.broadcast %28 : vector<1x32xf32> to vector<8x32xf32>
    %30 = arith.addf %27, %29 : vector<8x32xf32>
    %c0_12 = arith.constant 0 : index
    %c0_13 = arith.constant 0 : index
    %31 = vector.load %arg5[%c0_12, %c0_13] : memref<8x32xf32, #tpu.memory_space<vmem>>, vector<8x32xf32>
    tpu.vector_store %arg5[%c0_12, %c0_13], %30 {strides = array<i32>} : memref<8x32xf32, #tpu.memory_space<vmem>>, vector<8x32xf32>,
    return
  }
  func.func @transform_0(%arg0: i32) -> (i32, i32) {
    %c0_i32 = arith.constant 0 : i32
    %c0_i32_0 = arith.constant 0 : i32
    return %arg0, %c0_i32 : i32, i32
  }
  func.func @transform_1(%arg0: i32) -> (i32, i32) {
    %c0_i32 = arith.constant 0 : i32
    %c0_i32_0 = arith.constant 0 : i32
    return %arg0, %c0_i32 : i32, i32
  }
  func.func @transform_2(%arg0: i32) -> (i32, i32) {
    %c0_i32 = arith.constant 0 : i32
    %c0_i32_0 = arith.constant 0 : i32
    %c0_i32_1 = arith.constant 0 : i32
    return %c0_i32, %c0_i32_0 : i32, i32
  }
  func.func @transform_3(%arg0: i32) -> (i32, i32) {
    %c0_i32 = arith.constant 0 : i32
    %c0_i32_0 = arith.constant 0 : i32
    %c0_i32_1 = arith.constant 0 : i32
    return %c0_i32, %c0_i32_0 : i32, i32
  }
  func.func @transform_4(%arg0: i32) -> (i32, i32) {
    %c0_i32 = arith.constant 0 : i32
    %c0_i32_0 = arith.constant 0 : i32
    return %arg0, %c0_i32 : i32, i32
  }
}

</mosaic_0001>

<llo_original>
// kernel: tpu_custom_call.1
$region0: #{tpu_custom_call.1}
  #allocation0 [shape = 'u32[]', space=smem, size = 0x4, offset = 0x4, fixed_abs, tag = 'smem constant byte address 0x4 - core index']
  #allocation1 [shape = 'u32[144,128]{1,0:T(1,128)}', space=vmem, size = 0x12000, scoped, tag = 'internal scratch']
  %s0 = inlined_call_operand.hbm [shape: f32[16,32], index: 0, kind: input, shape index: {}]
  %s1 = inlined_call_operand.hbm [shape: f32[16,32], index: 1, kind: input, shape index: {}]
  %s2 = inlined_call_operand.hbm [shape: f32[32,32], index: 2, kind: input, shape index: {}]
  %s3 = inlined_call_operand.vmem [shape: f32[3,32], index: 3, kind: input, shape index: {}]
  %s4 = inlined_call_operand.hbm [shape: f32[16,32], index: 4, kind: output, shape index: {}]
  %s5 = sld [smem:[#allocation0]]
  $region61: #{tpu_custom_call.1} parent=0
    _
  %s7 = ssub.s32 1, %s5
  %s8 = scalar_select 0, %s7, %s5
  $region1: #{tpu_custom_call.1} parent=0
    #allocation2 [shape = 'u8[8192]{0}', space=vmem, size = 0x2000, scoped, tag = 'input window, operand 0']
    #allocation3 [shape = 's32[2]{0}', space=sflag, size = 0x8, scoped, tag = 'scoped memory for tpu_custom_call.1']
    #allocation4 [shape = 's32[2]{0}', space=sflag, size = 0x8, scoped, tag = 'scoped memory for tpu_custom_call.1']
    #allocation5 [shape = 'u8[8192]{0}', space=vmem, size = 0x2000, scoped, tag = 'input window, operand 1']
    #allocation6 [shape = 's32[2]{0}', space=sflag, size = 0x8, scoped, tag = 'scoped memory for tpu_custom_call.1']
    #allocation7 [shape = 'u8[16384]{0}', space=vmem, size = 0x4000, scoped, tag = 'input window, operand 2, single buffered']
    #allocation8 [shape = 'u8[8192]{0}', space=vmem, size = 0x2000, scoped, tag = 'output window, operand 0']
    %9 = vsyncpa [#allocation3], 0
    %s10 = scalar_lea.sflag [#allocation3], 1
    %11 = vsyncpa %s10, 0
    %12 = vsyncpa [#allocation6], 0
    %s13 = scalar_lea.sflag [#allocation6], 1
    %14 = vsyncpa %s13, 0
    %15 = vsyncpa [#allocation4], 0
    %s16 = scalar_lea.sflag [#allocation4], 1
    %17 = vsyncpa %s16, 0
    loop: start=0, step=1, limit=4
    $region2: #{tpu_custom_call.1} parent=1 // loop_pre_header
      _
    $region3: #{tpu_custom_call.1} parent=1 // loop_header
      %s19 = sphi 0, %s23
      %p20 = scmp.ge.s32.totalorder %s19, 4
      %s29 = sphi 0, %s31
      %s32 = sphi 0, %s29
      %s33 = sphi 0, %s32
      %s49 = sphi 0, %s33
      %s55 = sphi 0, %s57
      %s58 = sphi 0, %s55
      %s59 = sphi 0, %s58
      %s75 = sphi 0, %s59
      %s79 = sphi 0, %s79
      %s81 = sphi 0, %s79
      %s82 = sphi 0, %s81
      %s96 = sphi 0, %s82
      %s100 = sphi 0, %s100
      %s102 = sphi 0, %s100
      %s103 = sphi 0, %s102
      %s117 = sphi 0, %s103
      %s123 = sphi 0, %s125
      %s126 = sphi 0, %s123
      %s127 = sphi 0, %s126
      %s143 = sphi 0, %s127
    $region4: #{tpu_custom_call.1} parent=1 // loop_header_branch
      %22 = sbr.rel (%p20) target = $region8
    $region5: #{tpu_custom_call.1} parent=1 // loop_body
      %s24 = ssub.s32 %s19, 1
      %s25 = ssub.s32 %s19, 2
      %s26 = sadd.s32 %s19, 1
      %s27 = ssub.s32 %s19, %s26
      %p28 = scmp.eq.s32.totalorder %s27, 0
      %s30 = sadd.s32 %s29, 1
      %s31 = scalar_select %p28, %s29, %s30
      %p34 = pneg %p28
      %p35 = scmp.eq.s32.totalorder %s19, 1
      %p36 = por %p34, %p35
      %p37 = scmp.ne.s32.totalorder %s29, %s32
      %p38 = scmp.eq.s32.totalorder %s19, 0
      %p39 = por %p37, %p38
      %p40 = scmp.ne.s32.totalorder %s29, %s32
      %p41 = scmp.eq.s32.totalorder %s24, 1
      %p42 = por %p40, %p41
      %p43 = scmp.ne.s32.totalorder %s32, %s33
      %p44 = scmp.eq.s32.totalorder %s24, 0
      %p45 = por %p43, %p44
      %p46 = scmp.ne.s32.totalorder %s32, %s33
      %p47 = scmp.eq.s32.totalorder %s25, 1
      %p48 = por %p46, %p47
      %p50 = scmp.ne.s32.totalorder %s33, %s49
      %p51 = scmp.eq.s32.totalorder %s25, 0
      %p52 = por %p50, %p51
      %s53 = ssub.s32 %s19, %s26
      %p54 = scmp.eq.s32.totalorder %s53, 0
      %s56 = sadd.s32 %s55, 1
      %s57 = scalar_select %p54, %s55, %s56
      %p60 = pneg %p54
      %p61 = scmp.eq.s32.totalorder %s19, 1
      %p62 = por %p60, %p61
      %p63 = scmp.ne.s32.totalorder %s55, %s58
      %p64 = scmp.eq.s32.totalorder %s19, 0
      %p65 = por %p63, %p64
      %p66 = scmp.ne.s32.totalorder %s55, %s58
      %p67 = scmp.eq.s32.totalorder %s24, 1
      %p68 = por %p66, %p67
      %p69 = scmp.ne.s32.totalorder %s58, %s59
      %p70 = scmp.eq.s32.totalorder %s24, 0
      %p71 = por %p69, %p70
      %p72 = scmp.ne.s32.totalorder %s58, %s59
      %p73 = scmp.eq.s32.totalorder %s25, 1
      %p74 = por %p72, %p73
      %p76 = scmp.ne.s32.totalorder %s59, %s75
      %p77 = scmp.eq.s32.totalorder %s25, 0
      %p78 = por %p76, %p77
      %s80 = sadd.s32 %s79, 1
      %p83 = scmp.eq.s32.totalorder %s19, 1
      %p84 = scmp.ne.s32.totalorder %s79, %s81
      %p85 = scmp.eq.s32.totalorder %s19, 0
      %p86 = por %p84, %p85
      %p87 = scmp.ne.s32.totalorder %s79, %s81
      %p88 = scmp.eq.s32.totalorder %s24, 1
      %p89 = por %p87, %p88
      %p90 = scmp.ne.s32.totalorder %s81, %s82
      %p91 = scmp.eq.s32.totalorder %s24, 0
      %p92 = por %p90, %p91
      %p93 = scmp.ne.s32.totalorder %s81, %s82
      %p94 = scmp.eq.s32.totalorder %s25, 1
      %p95 = por %p93, %p94
      %p97 = scmp.ne.s32.totalorder %s82, %s96
      %p98 = scmp.eq.s32.totalorder %s25, 0
      %p99 = por %p97, %p98
      %s101 = sadd.s32 %s100, 1
      %p104 = scmp.eq.s32.totalorder %s19, 1
      %p105 = scmp.ne.s32.totalorder %s100, %s102
      %p106 = scmp.eq.s32.totalorder %s19, 0
      %p107 = por %p105, %p106
      %p108 = scmp.ne.s32.totalorder %s100, %s102
      %p109 = scmp.eq.s32.totalorder %s24, 1
      %p110 = por %p108, %p109
      %p111 = scmp.ne.s32.totalorder %s102, %s103
      %p112 = scmp.eq.s32.totalorder %s24, 0
      %p113 = por %p111, %p112
      %p114 = scmp.ne.s32.totalorder %s102, %s103
      %p115 = scmp.eq.s32.totalorder %s25, 1
      %p116 = por %p114, %p115
      %p118 = scmp.ne.s32.totalorder %s103, %s117
      %p119 = scmp.eq.s32.totalorder %s25, 0
      %p120 = por %p118, %p119
      %s121 = ssub.s32 %s19, %s26
      %p122 = scmp.eq.s32.totalorder %s121, 0
      %s124 = sadd.s32 %s123, 1
      %s125 = scalar_select %p122, %s123, %s124
      %p128 = pneg %p122
      %p129 = scmp.eq.s32.totalorder %s19, 1
      %p130 = por %p128, %p129
      %p131 = scmp.ne.s32.totalorder %s123, %s126
      %p132 = scmp.eq.s32.totalorder %s19, 0
      %p133 = por %p131, %p132
      %p134 = scmp.ne.s32.totalorder %s123, %s126
      %p135 = scmp.eq.s32.totalorder %s24, 1
      %p136 = por %p134, %p135
      %p137 = scmp.ne.s32.totalorder %s126, %s127
      %p138 = scmp.eq.s32.totalorder %s24, 0
      %p139 = por %p137, %p138
      %p140 = scmp.ne.s32.totalorder %s126, %s127
      %p141 = scmp.eq.s32.totalorder %s25, 1
      %p142 = por %p140, %p141
      %p144 = scmp.ne.s32.totalorder %s127, %s143
      %p145 = scmp.eq.s32.totalorder %s25, 0
      %p146 = por %p144, %p145
      %p147 = scmp.le.s32.totalorder 1, %s19
      %p148 = scmp.lt.s32.totalorder %s19, 3
      %p149 = pnand %p147, %p148
      %p150 = pneg %p149
      // Predicated region
      $region9: #{tpu_custom_call.1} parent=5 // pred_check
        _
      $region10: #{tpu_custom_call.1} parent=5 // pred_check_branch
        %152 = sbr.rel (%p149) target = $region12
      $region11: #{tpu_custom_call.1} parent=5 // pred_region
        %s153 = ssub.s32 %s19, 1
        // Predicated region
        $region13: #{tpu_custom_call.1} parent=11 // pred_check
          %p154 = pneg %p92
        $region14: #{tpu_custom_call.1} parent=11 // pred_check_branch
          %156 = sbr.rel (%p154) target = $region16
        $region15: #{tpu_custom_call.1} parent=11 // pred_region
          %s158 = ssub.s32 512, 512
          %159 = vsyncadd [#allocation6], %s158
          %s160 = sshll.u32 [#allocation7], 4
          %s161 = int_to_ptr.vmem [resolvable:$true] %s160
          %166 = dma.hbm_to_vmem [thread:$0]  %s2, 512, %s161, [#allocation6], 128, 128, 8
        $region16: #{tpu_custom_call.1} parent=11 // pred_fallthru
          _
        // Predicated region
        $region17: #{tpu_custom_call.1} parent=11 // pred_check
          %p167 = pneg %p113
        $region18: #{tpu_custom_call.1} parent=11 // pred_check_branch
          %169 = sbr.rel (%p167) target = $region20
        $region19: #{tpu_custom_call.1} parent=11 // pred_region
          _
        $region20: #{tpu_custom_call.1} parent=11 // pred_fallthru
          _
      $region12: #{tpu_custom_call.1} parent=5 // pred_fallthru
        _
      %p170 = scmp.lt.s32.totalorder %s19, 2
      // Predicated region
      $region21: #{tpu_custom_call.1} parent=5 // pred_check
        %p171 = pneg %p170
      $region22: #{tpu_custom_call.1} parent=5 // pred_check_branch
        %173 = sbr.rel (%p171) target = $region24
      $region23: #{tpu_custom_call.1} parent=5 // pred_region
        // Predicated region
        $region25: #{tpu_custom_call.1} parent=23 // pred_check
          %p174 = pneg %p39
        $region26: #{tpu_custom_call.1} parent=23 // pred_check_branch
          %176 = sbr.rel (%p174) target = $region28
        $region27: #{tpu_custom_call.1} parent=23 // pred_region
          %s177 = sand.u32 %s29, 1
          %s178 = scalar_lea.sflag [#allocation3], %s177
          %s179 = sand.u32 %s29, 1
          %s180 = smul.addr %s179, 8
          %s181 = scalar_lea.vmem [#allocation2], %s180
          %s183 = ssub.s32 128, 128
          %184 = vsyncadd %s178, %s183
          %s185 = smul.addr %s19, 128
          %s186 = scalar_lea.hbm %s0, %s185
          %s188 = sshll.u32 %s181, 4
          %s189 = int_to_ptr.vmem [resolvable:$true] %s188
          %191 = dma.hbm_to_vmem [thread:$0]  %s186, 128, %s189, %s178
        $region28: #{tpu_custom_call.1} parent=23 // pred_fallthru
          _
        // Predicated region
        $region29: #{tpu_custom_call.1} parent=23 // pred_check
          %p192 = pneg %p65
        $region30: #{tpu_custom_call.1} parent=23 // pred_check_branch
          %194 = sbr.rel (%p192) target = $region32
        $region31: #{tpu_custom_call.1} parent=23 // pred_region
          %s195 = sand.u32 %s19, 1
          %s196 = scalar_lea.sflag [#allocation6], %s195
          %s197 = sand.u32 %s55, 1
          %s198 = smul.addr %s197, 8
          %s199 = scalar_lea.vmem [#allocation5], %s198
          %s201 = ssub.s32 128, 128
          %202 = vsyncadd %s196, %s201
          %s203 = smul.addr %s19, 128
          %s204 = scalar_lea.hbm %s1, %s203
          %s206 = sshll.u32 %s199, 4
          %s207 = int_to_ptr.vmem [resolvable:$true] %s206
          %209 = dma.hbm_to_vmem [thread:$0]  %s204, 128, %s207, %s196
        $region32: #{tpu_custom_call.1} parent=23 // pred_fallthru
          _
      $region24: #{tpu_custom_call.1} parent=5 // pred_fallthru
        _
      %p210 = scmp.le.s32.totalorder 1, %s19
      %p211 = scmp.lt.s32.totalorder %s19, 3
      %p212 = pnand %p210, %p211
      %p213 = pneg %p212
      // Predicated region
      $region33: #{tpu_custom_call.1} parent=5 // pred_check
        _
      $region34: #{tpu_custom_call.1} parent=5 // pred_check_branch
        %215 = sbr.rel (%p212) target = $region36
      $region35: #{tpu_custom_call.1} parent=5 // pred_region
        %s216 = ssub.s32 %s19, 1
        %s217 = sand.u32 %s32, 1
        %s218 = scalar_lea.sflag [#allocation3], %s217
        %s219 = sand.u32 %s32, 1
        %s220 = smul.addr %s219, 8
        %s221 = scalar_lea.vmem [#allocation2], %s220
        // Predicated region
        $region37: #{tpu_custom_call.1} parent=35 // pred_check
          %p222 = pneg %p45
        $region38: #{tpu_custom_call.1} parent=35 // pred_check_branch
          %224 = sbr.rel (%p222) target = $region40
        $region39: #{tpu_custom_call.1} parent=35 // pred_region
          %225 = dma.done %s218, 128
        $region40: #{tpu_custom_call.1} parent=35 // pred_fallthru
          _
        %s226 = sand.u32 %s24, 1
        %s227 = scalar_lea.sflag [#allocation6], %s226
        %s228 = sand.u32 %s58, 1
        %s229 = smul.addr %s228, 8
        %s230 = scalar_lea.vmem [#allocation5], %s229
        // Predicated region
        $region41: #{tpu_custom_call.1} parent=35 // pred_check
          %p231 = pneg %p71
        $region42: #{tpu_custom_call.1} parent=35 // pred_check_branch
          %233 = sbr.rel (%p231) target = $region44
        $region43: #{tpu_custom_call.1} parent=35 // pred_region
          %234 = dma.done %s227, 128
        $region44: #{tpu_custom_call.1} parent=35 // pred_fallthru
          _
        // Predicated region
        $region45: #{tpu_custom_call.1} parent=35 // pred_check
          %p235 = pneg %p92
        $region46: #{tpu_custom_call.1} parent=35 // pred_check_branch
          %237 = sbr.rel (%p235) target = $region48
        $region47: #{tpu_custom_call.1} parent=35 // pred_region
          %238 = dma.done [#allocation6], 512
        $region48: #{tpu_custom_call.1} parent=35 // pred_fallthru
          _
        %s239 = sand.u32 %s32, 1
        %s240 = scalar_lea.sflag [#allocation3], %s239
        %s241 = sand.u32 %s32, 1
        %s242 = smul.addr %s241, 8
        %s243 = scalar_lea.vmem [#allocation2], %s242
        %p244 = pneg %p45
        %p245 = pneg %p42
        %s246 = sand.u32 %s24, 1
        %s247 = scalar_lea.sflag [#allocation6], %s246
        %s248 = sand.u32 %s58, 1
        %s249 = smul.addr %s248, 8
        %s250 = scalar_lea.vmem [#allocation5], %s249
        %p251 = pneg %p71
        %p252 = pneg %p68
        %p253 = pneg %p92
        %p254 = pneg %p89
        %p255 = pneg %p113
        %p256 = pneg %p110
        %p257 = pneg %p139
        %p258 = pneg %p136
        %s259 = sand.u32 %s126, 1
        %s260 = scalar_lea.sflag [#allocation4], %s259
        %s261 = sand.u32 %s126, 1
        %s262 = smul.addr %s261, 8
        %s263 = scalar_lea.vmem [#allocation8], %s262
        %v264 = vld [vmem:[%s221] sm:$0xff]
        %v265 = vld [vmem:[#allocation7] sm:$0xff]
        %v266 = vld [vmem:[#allocation7 + $0x8] sm:$0xff]
        %v267 = vld [vmem:[#allocation7 + $0x10] sm:$0xff]
        %v268 = vld [vmem:[#allocation7 + $0x18] sm:$0xff]
        %v269 = vld [vmem:[%s3] sm:$0x7]
        %v270 = vlaneseq
        %v271 = vshrl.u32 %v270, 7
        %v272 = vsub.s32 0, %v271
        %v273 = vrot.slane %v269, %v272
        %vm274 = vcmask 261120
        %v276 = vsel %vm274, %v264, 0
        %278 = vmatprep.subr.mxu0 0.0
        %279 = vmatpush1.msra.mxu0 %v265
        %280 = vmatprep.subr.mxu0 0.0
        %281 = vmatpush1.msra.mxu0 %v266
        %282 = vmatprep.subr.mxu0 0.0
        %283 = vmatpush1.msra.mxu0 %v267
        %284 = vmatprep.subr.mxu0 0.0
        %285 = vmatpush1.msra.mxu0 %v268
        %286 = vmatprep.subr.mxu0 0.0
        %287 = vmatpush1.msra.mxu0 0.0
        %288 = vmatprep.subr.mxu0 0.0
        %289 = vmatpush1.msra.mxu0 0.0
        %290 = vmatprep.subr.mxu0 0.0
        %291 = vmatpush1.msra.mxu0 0.0
        %292 = vmatprep.subr.mxu0 0.0
        %293 = vmatpush1.msra.mxu0 0.0
        %294 = vmatprep.subr.mxu0 0.0
        %295 = vmatpush1.msra.mxu0 0.0
        %296 = vmatprep.subr.mxu0 0.0
        %297 = vmatpush1.msra.mxu0 0.0
        %298 = vmatprep.subr.mxu0 0.0
        %299 = vmatpush1.msra.mxu0 0.0
        %300 = vmatprep.subr.mxu0 0.0
        %301 = vmatpush1.msra.mxu0 0.0
        %302 = vmatprep.subr.mxu0 0.0
        %303 = vmatpush1.msra.mxu0 0.0
        %304 = vmatprep.subr.mxu0 0.0
        %305 = vmatpush1.msra.mxu0 0.0
        %306 = vmatprep.subr.mxu0 0.0
        %307 = vmatpush1.msra.mxu0 0.0
        %308 = vmatprep.subr.mxu0 0.0
        %309 = vmatpush1.msra.mxu0 0.0
        %310 = vmatprep.subr.mxu0 0.0
        %311 = vmatpush1.msra.mxu0 0.0
        %312 = vmatprep.subr.mxu0 0.0
        %313 = vmatpush1.msra.mxu0 0.0
        %314 = vmatprep.subr.mxu0 0.0
        %315 = vmatpush1.msra.mxu0 0.0
        %316 = vmatprep.subr.mxu0 0.0
        %317 = vmatpush1.msra.mxu0 0.0
        %318 = vmatprep.subr.mxu0 0.0
        %319 = vmatpush1.msra.mxu0 0.0
        %320 = vmatprep.subr.mxu0 0.0
        %321 = vmatpush1.msra.mxu0 0.0
        %322 = vmatprep.subr.mxu0 0.0
        %323 = vmatpush1.msra.mxu0 0.0
        %324 = vmatprep.subr.mxu0 0.0
        %325 = vmatpush1.msra.mxu0 0.0
        %326 = vmatprep.subr.mxu0 0.0
        %327 = vmatpush1.msra.mxu0 0.0
        %328 = vmatprep.subr.mxu0 0.0
        %329 = vmatpush1.msra.mxu0 0.0
        %330 = vmatprep.subr.mxu0 0.0
        %331 = vmatpush1.msra.mxu0 0.0
        %332 = vmatprep.subr.mxu0 0.0
        %333 = vmatpush1.msra.mxu0 0.0
        %334 = vmatprep.subr.mxu0 0.0
        %335 = vmatpush1.msra.mxu0 0.0
        %336 = vmatprep.subr.mxu0 0.0
        %337 = vmatpush1.msra.mxu0 0.0
        %338 = vmatprep.subr.mxu0 0.0
        %339 = vmatpush1.msra.mxu0 0.0
        %340 = vmatprep.subr.mxu0 0.0
        %341 = vmatpush1.msra.mxu0 0.0
        %342 = vmatprep.mubr.f32.mxu0 0.0
        %343 = vmatmul.mubr.f32.gmra.mrb[0].mxu0 %v276
        %v344 = vpop.f32.mrb[0].mxu0
        %v345 = vadd.f32 %v273, %v344
        %v346 = vpop.f32.mrb[0].mxu0
        %347 = vdwg.mxu0
        %v348 = vld [vmem:[%s230] sm:$0xff]
        %v349 = vadd.f32 %v345, %v348
        %v350 = vsel %vm274, %v349, 0.0
        %351 = vadd.xlane.f32.xlu0 %v350
        %v352 = vpop.xlane.xlu0 %351
        %v353 = vrcp.pop 32.0
        %v354 = vmul.f32 %v352, %v353
        %v355 = vsub.f32 %v349, %v354
        %v356 = vmul.f32 %v355, %v355
        %v357 = vsel %vm274, %v356, 0.0
        %358 = vadd.xlane.f32.xlu0 %v357
        %v359 = vpop.xlane.xlu0 %358
        %v360 = vmul.f32 %v359, %v353
        %v361 = vadd.f32 %v360, 1e-12
        %v362 = vrsqrt.pop %v361
        %v363 = vmul.f32 %v355, %v362
        %v364 = vlaneseq
        %v365 = vshrl.u32 %v364, 7
        %v366 = vsub.s32 1, %v365
        %v367 = vrot.slane %v269, %v366
        %v368 = vmul.f32 %v363, %v367
        %v369 = vlaneseq
        %v370 = vshrl.u32 %v369, 7
        %v371 = vsub.s32 2, %v370
        %v372 = vrot.slane %v269, %v371
        %v373 = vadd.f32 %v368, %v372
        %374 = vst.msk [vmem:[%s263] sm:$0xff] %vm274, %v373
        %s375 = sand.u32 %s126, 1
        %s376 = scalar_lea.sflag [#allocation4], %s375
        %s377 = sand.u32 %s126, 1
        %s378 = smul.addr %s377, 8
        %s379 = scalar_lea.vmem [#allocation8], %s378
        // Predicated region
        $region49: #{tpu_custom_call.1} parent=35 // pred_check
          %p380 = pneg %p136
        $region50: #{tpu_custom_call.1} parent=35 // pred_check_branch
          %382 = sbr.rel (%p380) target = $region52
        $region51: #{tpu_custom_call.1} parent=35 // pred_region
          %s384 = ssub.s32 128, 128
          %385 = vsyncadd %s376, %s384
          %s386 = smul.addr %s24, 128
          %s387 = scalar_lea.hbm %s4, %s386
          %s389 = sshll.u32 %s379, 4
          %s390 = int_to_ptr.vmem [resolvable:$true] %s389
          %392 = dma.vmem_to_hbm [thread:$0]  %s390, 128, %s387, %s376
        $region52: #{tpu_custom_call.1} parent=35 // pred_fallthru
          _
      $region36: #{tpu_custom_call.1} parent=5 // pred_fallthru
        _
      %p393 = scmp.le.s32.totalorder 2, %s19
      // Predicated region
      $region53: #{tpu_custom_call.1} parent=5 // pred_check
        %p394 = pneg %p393
      $region54: #{tpu_custom_call.1} parent=5 // pred_check_branch
        %396 = sbr.rel (%p394) target = $region56
      $region55: #{tpu_custom_call.1} parent=5 // pred_region
        %s397 = ssub.s32 %s19, 2
        // Predicated region
        $region57: #{tpu_custom_call.1} parent=55 // pred_check
          %p398 = pneg %p142
        $region58: #{tpu_custom_call.1} parent=55 // pred_check_branch
          %400 = sbr.rel (%p398) target = $region60
        $region59: #{tpu_custom_call.1} parent=55 // pred_region
          %s401 = sand.u32 %s127, 1
          %s402 = scalar_lea.sflag [#allocation4], %s401
          %s403 = sand.u32 %s127, 1
          %s404 = smul.addr %s403, 8
          %s405 = scalar_lea.vmem [#allocation8], %s404
          %406 = dma.done %s402, 128
        $region60: #{tpu_custom_call.1} parent=55 // pred_fallthru
          _
      $region56: #{tpu_custom_call.1} parent=5 // pred_fallthru
        _
    $region6: #{tpu_custom_call.1} parent=1 // loop_footer
      %s23 = sadd.s32 1, %s19
    $region7: #{tpu_custom_call.1} parent=1 // loop_footer_branch
      %18 = sbr.rel target = $region3
    $region8: #{tpu_custom_call.1} parent=1 // loop_exit
      _
    %407 = vsyncpa [#allocation3], 1
    %s408 = scalar_lea.sflag [#allocation3], 1
    %409 = vsyncpa %s408, 1
    %410 = vsyncpa [#allocation6], 1
    %s411 = scalar_lea.sflag [#allocation6], 1
    %412 = vsyncpa %s411, 1
    %413 = vsyncpa [#allocation4], 1
    %s414 = scalar_lea.sflag [#allocation4], 1
    %415 = vsyncpa %s414, 1

// kernel: tpu_custom_call.1
$region0: #{tpu_custom_call.1}
  #allocation0 [shape = 'u32[]', space=smem, size = 0x4, offset = 0x4, fixed_abs, tag = 'smem constant byte address 0x4 - core index']
  #allocation1 [shape = 'u32[144,128]{1,0:T(1,128)}', space=vmem, size = 0x12000, scoped, tag = 'internal scratch']
  %s0 = inlined_call_operand.hbm [shape: f32[16,32], index: 0, kind: input, shape index: {}]
  %s1 = inlined_call_operand.hbm [shape: f32[16,32], index: 1, kind: input, shape index: {}]
  %s2 = inlined_call_operand.hbm [shape: f32[32,32], index: 2, kind: input, shape index: {}]
  %s3 = inlined_call_operand.vmem [shape: f32[3,32], index: 3, kind: input, shape index: {}]
  %s4 = inlined_call_operand.hbm [shape: f32[16,32], index: 4, kind: output, shape index: {}]
  %s5 = sld [smem:[#allocation0]]
  $region61: #{tpu_custom_call.1} parent=0
    _
  %s7 = ssub.s32 1, %s5
  %s8 = scalar_select 0, %s7, %s5
  $region1: #{tpu_custom_call.1} parent=0
    #allocation2 [shape = 'u8[8192]{0}', space=vmem, size = 0x2000, scoped, tag = 'input window, operand 0']
    #allocation3 [shape = 's32[2]{0}', space=sflag, size = 0x8, scoped, tag = 'scoped memory for tpu_custom_call.1']
    #allocation4 [shape = 's32[2]{0}', space=sflag, size = 0x8, scoped, tag = 'scoped memory for tpu_custom_call.1']
    #allocation5 [shape = 'u8[8192]{0}', space=vmem, size = 0x2000, scoped, tag = 'input window, operand 1']
    #allocation6 [shape = 's32[2]{0}', space=sflag, size = 0x8, scoped, tag = 'scoped memory for tpu_custom_call.1']
    #allocation7 [shape = 'u8[16384]{0}', space=vmem, size = 0x4000, scoped, tag = 'input window, operand 2, single buffered']
    #allocation8 [shape = 'u8[8192]{0}', space=vmem, size = 0x2000, scoped, tag = 'output window, operand 0']
    %9 = vsyncpa [#allocation3], 0
    %s10 = scalar_lea.sflag [#allocation3], 1
    %11 = vsyncpa %s10, 0
    %12 = vsyncpa [#allocation6], 0
    %s13 = scalar_lea.sflag [#allocation6], 1
    %14 = vsyncpa %s13, 0
    %15 = vsyncpa [#allocation4], 0
    %s16 = scalar_lea.sflag [#allocation4], 1
    %17 = vsyncpa %s16, 0
    loop: start=0, step=1, limit=4
    $region2: #{tpu_custom_call.1} parent=1 // loop_pre_header
      _
    $region3: #{tpu_custom_call.1} parent=1 // loop_header
      %s19 = sphi 0, %s23
      %p20 = scmp.ge.s32.totalorder %s19, 4
      %s29 = sphi 0, %s31
      %s32 = sphi 0, %s29
      %s33 = sphi 0, %s32
      %s49 = sphi 0, %s33
      %s55 = sphi 0, %s57
      %s58 = sphi 0, %s55
      %s59 = sphi 0, %s58
      %s75 = sphi 0, %s59
      %s79 = sphi 0, %s79
      %s81 = sphi 0, %s79
      %s82 = sphi 0, %s81
      %s96 = sphi 0, %s82
      %s100 = sphi 0, %s100
      %s102 = sphi 0, %s100
      %s103 = sphi 0, %s102
      %s117 = sphi 0, %s103
      %s123 = sphi 0, %s125
      %s126 = sphi 0, %s123
      %s127 = sphi 0, %s126
      %s143 = sphi 0, %s127
    $region4: #{tpu_custom_call.1} parent=1 // loop_header_branch
      %22 = sbr.rel (%p20) target = $region8
    $region5: #{tpu_custom_call.1} parent=1 // loop_body
      %s24 = ssub.s32 %s19, 1
      %s25 = ssub.s32 %s19, 2
      %s26 = sadd.s32 %s19, 1
      %s27 = ssub.s32 %s19, %s26
      %p28 = scmp.eq.s32.totalorder %s27, 0
      %s30 = sadd.s32 %s29, 1
      %s31 = scalar_select %p28, %s29, %s30
      %p34 = pneg %p28
      %p35 = scmp.eq.s32.totalorder %s19, 1
      %p36 = por %p34, %p35
      %p37 = scmp.ne.s32.totalorder %s29, %s32
      %p38 = scmp.eq.s32.totalorder %s19, 0
      %p39 = por %p37, %p38
      %p40 = scmp.ne.s32.totalorder %s29, %s32
      %p41 = scmp.eq.s32.totalorder %s24, 1
      %p42 = por %p40, %p41
      %p43 = scmp.ne.s32.totalorder %s32, %s33
      %p44 = scmp.eq.s32.totalorder %s24, 0
      %p45 = por %p43, %p44
      %p46 = scmp.ne.s32.totalorder %s32, %s33
      %p47 = scmp.eq.s32.totalorder %s25, 1
      %p48 = por %p46, %p47
      %p50 = scmp.ne.s32.totalorder %s33, %s49
      %p51 = scmp.eq.s32.totalorder %s25, 0
      %p52 = por %p50, %p51
      %s53 = ssub.s32 %s19, %s26
      %p54 = scmp.eq.s32.totalorder %s53, 0
      %s56 = sadd.s32 %s55, 1
      %s57 = scalar_select %p54, %s55, %s56
      %p60 = pneg %p54
      %p61 = scmp.eq.s32.totalorder %s19, 1
      %p62 = por %p60, %p61
      %p63 = scmp.ne.s32.totalorder %s55, %s58
      %p64 = scmp.eq.s32.totalorder %s19, 0
      %p65 = por %p63, %p64
      %p66 = scmp.ne.s32.totalorder %s55, %s58
      %p67 = scmp.eq.s32.totalorder %s24, 1
      %p68 = por %p66, %p67
      %p69 = scmp.ne.s32.totalorder %s58, %s59
      %p70 = scmp.eq.s32.totalorder %s24, 0
      %p71 = por %p69, %p70
      %p72 = scmp.ne.s32.totalorder %s58, %s59
      %p73 = scmp.eq.s32.totalorder %s25, 1
      %p74 = por %p72, %p73
      %p76 = scmp.ne.s32.totalorder %s59, %s75
      %p77 = scmp.eq.s32.totalorder %s25, 0
      %p78 = por %p76, %p77
      %s80 = sadd.s32 %s79, 1
      %p83 = scmp.eq.s32.totalorder %s19, 1
      %p84 = scmp.ne.s32.totalorder %s79, %s81
      %p85 = scmp.eq.s32.totalorder %s19, 0
      %p86 = por %p84, %p85
      %p87 = scmp.ne.s32.totalorder %s79, %s81
      %p88 = scmp.eq.s32.totalorder %s24, 1
      %p89 = por %p87, %p88
      %p90 = scmp.ne.s32.totalorder %s81, %s82
      %p91 = scmp.eq.s32.totalorder %s24, 0
      %p92 = por %p90, %p91
      %p93 = scmp.ne.s32.totalorder %s81, %s82
      %p94 = scmp.eq.s32.totalorder %s25, 1
      %p95 = por %p93, %p94
      %p97 = scmp.ne.s32.totalorder %s82, %s96
      %p98 = scmp.eq.s32.totalorder %s25, 0
      %p99 = por %p97, %p98
      %s101 = sadd.s32 %s100, 1
      %p104 = scmp.eq.s32.totalorder %s19, 1
      %p105 = scmp.ne.s32.totalorder %s100, %s102
      %p106 = scmp.eq.s32.totalorder %s19, 0
      %p107 = por %p105, %p106
      %p108 = scmp.ne.s32.totalorder %s100, %s102
      %p109 = scmp.eq.s32.totalorder %s24, 1
      %p110 = por %p108, %p109
      %p111 = scmp.ne.s32.totalorder %s102, %s103
      %p112 = scmp.eq.s32.totalorder %s24, 0
      %p113 = por %p111, %p112
      %p114 = scmp.ne.s32.totalorder %s102, %s103
      %p115 = scmp.eq.s32.totalorder %s25, 1
      %p116 = por %p114, %p115
      %p118 = scmp.ne.s32.totalorder %s103, %s117
      %p119 = scmp.eq.s32.totalorder %s25, 0
      %p120 = por %p118, %p119
      %s121 = ssub.s32 %s19, %s26
      %p122 = scmp.eq.s32.totalorder %s121, 0
      %s124 = sadd.s32 %s123, 1
      %s125 = scalar_select %p122, %s123, %s124
      %p128 = pneg %p122
      %p129 = scmp.eq.s32.totalorder %s19, 1
      %p130 = por %p128, %p129
      %p131 = scmp.ne.s32.totalorder %s123, %s126
      %p132 = scmp.eq.s32.totalorder %s19, 0
      %p133 = por %p131, %p132
      %p134 = scmp.ne.s32.totalorder %s123, %s126
      %p135 = scmp.eq.s32.totalorder %s24, 1
      %p136 = por %p134, %p135
      %p137 = scmp.ne.s32.totalorder %s126, %s127
      %p138 = scmp.eq.s32.totalorder %s24, 0
      %p139 = por %p137, %p138
      %p140 = scmp.ne.s32.totalorder %s126, %s127
      %p141 = scmp.eq.s32.totalorder %s25, 1
      %p142 = por %p140, %p141
      %p144 = scmp.ne.s32.totalorder %s127, %s143
      %p145 = scmp.eq.s32.totalorder %s25, 0
      %p146 = por %p144, %p145
      %p147 = scmp.le.s32.totalorder 1, %s19
      %p148 = scmp.lt.s32.totalorder %s19, 3
      %p149 = pnand %p147, %p148
      %p150 = pneg %p149
      // Predicated region
      $region9: #{tpu_custom_call.1} parent=5 // pred_check
        _
      $region10: #{tpu_custom_call.1} parent=5 // pred_check_branch
        %152 = sbr.rel (%p149) target = $region12
      $region11: #{tpu_custom_call.1} parent=5 // pred_region
        %s153 = ssub.s32 %s19, 1
        // Predicated region
        $region13: #{tpu_custom_call.1} parent=11 // pred_check
          %p154 = pneg %p92
        $region14: #{tpu_custom_call.1} parent=11 // pred_check_branch
          %156 = sbr.rel (%p154) target = $region16
        $region15: #{tpu_custom_call.1} parent=11 // pred_region
          %s158 = ssub.s32 512, 512
          %159 = vsyncadd [#allocation6], %s158
          %s160 = sshll.u32 [#allocation7], 4
          %s161 = int_to_ptr.vmem [resolvable:$true] %s160
          %166 = dma.hbm_to_vmem [thread:$0]  %s2, 512, %s161, [#allocation6], 128, 128, 8
        $region16: #{tpu_custom_call.1} parent=11 // pred_fallthru
          _
        // Predicated region
        $region17: #{tpu_custom_call.1} parent=11 // pred_check
          %p167 = pneg %p113
        $region18: #{tpu_custom_call.1} parent=11 // pred_check_branch
          %169 = sbr.rel (%p167) target = $region20
        $region19: #{tpu_custom_call.1} parent=11 // pred_region
          _
        $region20: #{tpu_custom_call.1} parent=11 // pred_fallthru
          _
      $region12: #{tpu_custom_call.1} parent=5 // pred_fallthru
        _
      %p170 = scmp.lt.s32.totalorder %s19, 2
      // Predicated region
      $region21: #{tpu_custom_call.1} parent=5 // pred_check
        %p171 = pneg %p170
      $region22: #{tpu_custom_call.1} parent=5 // pred_check_branch
        %173 = sbr.rel (%p171) target = $region24
      $region23: #{tpu_custom_call.1} parent=5 // pred_region
        // Predicated region
        $region25: #{tpu_custom_call.1} parent=23 // pred_check
          %p174 = pneg %p39
        $region26: #{tpu_custom_call.1} parent=23 // pred_check_branch
          %176 = sbr.rel (%p174) target = $region28
        $region27: #{tpu_custom_call.1} parent=23 // pred_region
          %s177 = sand.u32 %s29, 1
          %s178 = scalar_lea.sflag [#allocation3], %s177
          %s179 = sand.u32 %s29, 1
          %s180 = smul.addr %s179, 8
          %s181 = scalar_lea.vmem [#allocation2], %s180
          %s183 = ssub.s32 128, 128
          %184 = vsyncadd %s178, %s183
          %s185 = smul.addr %s19, 128
          %s186 = scalar_lea.hbm %s0, %s185
          %s188 = sshll.u32 %s181, 4
          %s189 = int_to_ptr.vmem [resolvable:$true] %s188
          %191 = dma.hbm_to_vmem [thread:$0]  %s186, 128, %s189, %s178
        $region28: #{tpu_custom_call.1} parent=23 // pred_fallthru
          _
        // Predicated region
        $region29: #{tpu_custom_call.1} parent=23 // pred_check
          %p192 = pneg %p65
        $region30: #{tpu_custom_call.1} parent=23 // pred_check_branch
          %194 = sbr.rel (%p192) target = $region32
        $region31: #{tpu_custom_call.1} parent=23 // pred_region
          %s195 = sand.u32 %s19, 1
          %s196 = scalar_lea.sflag [#allocation6], %s195
          %s197 = sand.u32 %s55, 1
          %s198 = smul.addr %s197, 8
          %s199 = scalar_lea.vmem [#allocation5], %s198
          %s201 = ssub.s32 128, 128
          %202 = vsyncadd %s196, %s201
          %s203 = smul.addr %s19, 128
          %s204 = scalar_lea.hbm %s1, %s203
          %s206 = sshll.u32 %s199, 4
          %s207 = int_to_ptr.vmem [resolvable:$true] %s206
          %209 = dma.hbm_to_vmem [thread:$0]  %s204, 128, %s207, %s196
        $region32: #{tpu_custom_call.1} parent=23 // pred_fallthru
          _
      $region24: #{tpu_custom_call.1} parent=5 // pred_fallthru
        _
      %p210 = scmp.le.s32.totalorder 1, %s19
      %p211 = scmp.lt.s32.totalorder %s19, 3
      %p212 = pnand %p210, %p211
      %p213 = pneg %p212
      // Predicated region
      $region33: #{tpu_custom_call.1} parent=5 // pred_check
        _
      $region34: #{tpu_custom_call.1} parent=5 // pred_check_branch
        %215 = sbr.rel (%p212) target = $region36
      $region35: #{tpu_custom_call.1} parent=5 // pred_region
        %s216 = ssub.s32 %s19, 1
        %s217 = sand.u32 %s32, 1
        %s218 = scalar_lea.sflag [#allocation3], %s217
        %s219 = sand.u32 %s32, 1
        %s220 = smul.addr %s219, 8
        %s221 = scalar_lea.vmem [#allocation2], %s220
        // Predicated region
        $region37: #{tpu_custom_call.1} parent=35 // pred_check
          %p222 = pneg %p45
        $region38: #{tpu_custom_call.1} parent=35 // pred_check_branch
          %224 = sbr.rel (%p222) target = $region40
        $region39: #{tpu_custom_call.1} parent=35 // pred_region
          %225 = dma.done %s218, 128
        $region40: #{tpu_custom_call.1} parent=35 // pred_fallthru
          _
        %s226 = sand.u32 %s24, 1
        %s227 = scalar_lea.sflag [#allocation6], %s226
        %s228 = sand.u32 %s58, 1
        %s229 = smul.addr %s228, 8
        %s230 = scalar_lea.vmem [#allocation5], %s229
        // Predicated region
        $region41: #{tpu_custom_call.1} parent=35 // pred_check
          %p231 = pneg %p71
        $region42: #{tpu_custom_call.1} parent=35 // pred_check_branch
          %233 = sbr.rel (%p231) target = $region44
        $region43: #{tpu_custom_call.1} parent=35 // pred_region
          %234 = dma.done %s227, 128
        $region44: #{tpu_custom_call.1} parent=35 // pred_fallthru
          _
        // Predicated region
        $region45: #{tpu_custom_call.1} parent=35 // pred_check
          %p235 = pneg %p92
        $region46: #{tpu_custom_call.1} parent=35 // pred_check_branch
          %237 = sbr.rel (%p235) target = $region48
        $region47: #{tpu_custom_call.1} parent=35 // pred_region
          %238 = dma.done [#allocation6], 512
        $region48: #{tpu_custom_call.1} parent=35 // pred_fallthru
          _
        %s239 = sand.u32 %s32, 1
        %s240 = scalar_lea.sflag [#allocation3], %s239
        %s241 = sand.u32 %s32, 1
        %s242 = smul.addr %s241, 8
        %s243 = scalar_lea.vmem [#allocation2], %s242
        %p244 = pneg %p45
        %p245 = pneg %p42
        %s246 = sand.u32 %s24, 1
        %s247 = scalar_lea.sflag [#allocation6], %s246
        %s248 = sand.u32 %s58, 1
        %s249 = smul.addr %s248, 8
        %s250 = scalar_lea.vmem [#allocation5], %s249
        %p251 = pneg %p71
        %p252 = pneg %p68
        %p253 = pneg %p92
        %p254 = pneg %p89
        %p255 = pneg %p113
        %p256 = pneg %p110
        %p257 = pneg %p139
        %p258 = pneg %p136
        %s259 = sand.u32 %s126, 1
        %s260 = scalar_lea.sflag [#allocation4], %s259
        %s261 = sand.u32 %s126, 1
        %s262 = smul.addr %s261, 8
        %s263 = scalar_lea.vmem [#allocation8], %s262
        %v264 = vld [vmem:[%s221] sm:$0xff]
        %v265 = vld [vmem:[#allocation7] sm:$0xff]
        %v266 = vld [vmem:[#allocation7 + $0x8] sm:$0xff]
        %v267 = vld [vmem:[#allocation7 + $0x10] sm:$0xff]
        %v268 = vld [vmem:[#allocation7 + $0x18] sm:$0xff]
        %v269 = vld [vmem:[%s3] sm:$0x7]
        %v270 = vlaneseq
        %v271 = vshrl.u32 %v270, 7
        %v272 = vsub.s32 0, %v271
        %v273 = vrot.slane %v269, %v272
        %vm274 = vcmask 261120
        %v276 = vsel %vm274, %v264, 0
        %278 = vmatprep.subr.mxu0 0.0
        %279 = vmatpush1.msra.mxu0 %v265
        %280 = vmatprep.subr.mxu0 0.0
        %281 = vmatpush1.msra.mxu0 %v266
        %282 = vmatprep.subr.mxu0 0.0
        %283 = vmatpush1.msra.mxu0 %v267
        %284 = vmatprep.subr.mxu0 0.0
        %285 = vmatpush1.msra.mxu0 %v268
        %286 = vmatprep.subr.mxu0 0.0
        %287 = vmatpush1.msra.mxu0 0.0
        %288 = vmatprep.subr.mxu0 0.0
        %289 = vmatpush1.msra.mxu0 0.0
        %290 = vmatprep.subr.mxu0 0.0
        %291 = vmatpush1.msra.mxu0 0.0
        %292 = vmatprep.subr.mxu0 0.0
        %293 = vmatpush1.msra.mxu0 0.0
        %294 = vmatprep.subr.mxu0 0.0
        %295 = vmatpush1.msra.mxu0 0.0
        %296 = vmatprep.subr.mxu0 0.0
        %297 = vmatpush1.msra.mxu0 0.0
        %298 = vmatprep.subr.mxu0 0.0
        %299 = vmatpush1.msra.mxu0 0.0
        %300 = vmatprep.subr.mxu0 0.0
        %301 = vmatpush1.msra.mxu0 0.0
        %302 = vmatprep.subr.mxu0 0.0
        %303 = vmatpush1.msra.mxu0 0.0
        %304 = vmatprep.subr.mxu0 0.0
        %305 = vmatpush1.msra.mxu0 0.0
        %306 = vmatprep.subr.mxu0 0.0
        %307 = vmatpush1.msra.mxu0 0.0
        %308 = vmatprep.subr.mxu0 0.0
        %309 = vmatpush1.msra.mxu0 0.0
        %310 = vmatprep.subr.mxu0 0.0
        %311 = vmatpush1.msra.mxu0 0.0
        %312 = vmatprep.subr.mxu0 0.0
        %313 = vmatpush1.msra.mxu0 0.0
        %314 = vmatprep.subr.mxu0 0.0
        %315 = vmatpush1.msra.mxu0 0.0
        %316 = vmatprep.subr.mxu0 0.0
        %317 = vmatpush1.msra.mxu0 0.0
        %318 = vmatprep.subr.mxu0 0.0
        %319 = vmatpush1.msra.mxu0 0.0
        %320 = vmatprep.subr.mxu0 0.0
        %321 = vmatpush1.msra.mxu0 0.0
        %322 = vmatprep.subr.mxu0 0.0
        %323 = vmatpush1.msra.mxu0 0.0
        %324 = vmatprep.subr.mxu0 0.0
        %325 = vmatpush1.msra.mxu0 0.0
        %326 = vmatprep.subr.mxu0 0.0
        %327 = vmatpush1.msra.mxu0 0.0
        %328 = vmatprep.subr.mxu0 0.0
        %329 = vmatpush1.msra.mxu0 0.0
        %330 = vmatprep.subr.mxu0 0.0
        %331 = vmatpush1.msra.mxu0 0.0
        %332 = vmatprep.subr.mxu0 0.0
        %333 = vmatpush1.msra.mxu0 0.0
        %334 = vmatprep.subr.mxu0 0.0
        %335 = vmatpush1.msra.mxu0 0.0
        %336 = vmatprep.subr.mxu0 0.0
        %337 = vmatpush1.msra.mxu0 0.0
        %338 = vmatprep.subr.mxu0 0.0
        %339 = vmatpush1.msra.mxu0 0.0
        %340 = vmatprep.subr.mxu0 0.0
        %341 = vmatpush1.msra.mxu0 0.0
        %342 = vmatprep.mubr.f32.mxu0 0.0
        %343 = vmatmul.mubr.f32.gmra.mrb[0].mxu0 %v276
        %v344 = vpop.f32.mrb[0].mxu0
        %v345 = vadd.f32 %v273, %v344
        %v346 = vpop.f32.mrb[0].mxu0
        %347 = vdwg.mxu0
        %v348 = vld [vmem:[%s230] sm:$0xff]
        %v349 = vadd.f32 %v345, %v348
        %v350 = vsel %vm274, %v349, 0.0
        %351 = vadd.xlane.f32.xlu0 %v350
        %v352 = vpop.xlane.xlu0 %351
        %v353 = vrcp.pop 32.0
        %v354 = vmul.f32 %v352, %v353
        %v355 = vsub.f32 %v349, %v354
        %v356 = vmul.f32 %v355, %v355
        %v357 = vsel %vm274, %v356, 0.0
        %358 = vadd.xlane.f32.xlu0 %v357
        %v359 = vpop.xlane.xlu0 %358
        %v360 = vmul.f32 %v359, %v353
        %v361 = vadd.f32 %v360, 1e-12
        %v362 = vrsqrt.pop %v361
        %v363 = vmul.f32 %v355, %v362
        %v364 = vlaneseq
        %v365 = vshrl.u32 %v364, 7
        %v366 = vsub.s32 1, %v365
        %v367 = vrot.slane %v269, %v366
        %v368 = vmul.f32 %v363, %v367
        %v369 = vlaneseq
        %v370 = vshrl.u32 %v369, 7
        %v371 = vsub.s32 2, %v370
        %v372 = vrot.slane %v269, %v371
        %v373 = vadd.f32 %v368, %v372
        %374 = vst.msk [vmem:[%s263] sm:$0xff] %vm274, %v373
        %s375 = sand.u32 %s126, 1
        %s376 = scalar_lea.sflag [#allocation4], %s375
        %s377 = sand.u32 %s126, 1
        %s378 = smul.addr %s377, 8
        %s379 = scalar_lea.vmem [#allocation8], %s378
        // Predicated region
        $region49: #{tpu_custom_call.1} parent=35 // pred_check
          %p380 = pneg %p136
        $region50: #{tpu_custom_call.1} parent=35 // pred_check_branch
          %382 = sbr.rel (%p380) target = $region52
        $region51: #{tpu_custom_call.1} parent=35 // pred_region
          %s384 = ssub.s32 128, 128
          %385 = vsyncadd %s376, %s384
          %s386 = smul.addr %s24, 128
          %s387 = scalar_lea.hbm %s4, %s386
          %s389 = sshll.u32 %s379, 4
          %s390 = int_to_ptr.vmem [resolvable:$true] %s389
          %392 = dma.vmem_to_hbm [thread:$0]  %s390, 128, %s387, %s376
        $region52: #{tpu_custom_call.1} parent=35 // pred_fallthru
          _
      $region36: #{tpu_custom_call.1} parent=5 // pred_fallthru
        _
      %p393 = scmp.le.s32.totalorder 2, %s19
      // Predicated region
      $region53: #{tpu_custom_call.1} parent=5 // pred_check
        %p394 = pneg %p393
      $region54: #{tpu_custom_call.1} parent=5 // pred_check_branch
        %396 = sbr.rel (%p394) target = $region56
      $region55: #{tpu_custom_call.1} parent=5 // pred_region
        %s397 = ssub.s32 %s19, 2
        // Predicated region
        $region57: #{tpu_custom_call.1} parent=55 // pred_check
          %p398 = pneg %p142
        $region58: #{tpu_custom_call.1} parent=55 // pred_check_branch
          %400 = sbr.rel (%p398) target = $region60
        $region59: #{tpu_custom_call.1} parent=55 // pred_region
          %s401 = sand.u32 %s127, 1
          %s402 = scalar_lea.sflag [#allocation4], %s401
          %s403 = sand.u32 %s127, 1
          %s404 = smul.addr %s403, 8
          %s405 = scalar_lea.vmem [#allocation8], %s404
          %406 = dma.done %s402, 128
        $region60: #{tpu_custom_call.1} parent=55 // pred_fallthru
          _
      $region56: #{tpu_custom_call.1} parent=5 // pred_fallthru
        _
    $region6: #{tpu_custom_call.1} parent=1 // loop_footer
      %s23 = sadd.s32 1, %s19
    $region7: #{tpu_custom_call.1} parent=1 // loop_footer_branch
      %18 = sbr.rel target = $region3
    $region8: #{tpu_custom_call.1} parent=1 // loop_exit
      _
    %407 = vsyncpa [#allocation3], 1
    %s408 = scalar_lea.sflag [#allocation3], 1
    %409 = vsyncpa %s408, 1
    %410 = vsyncpa [#allocation6], 1
    %s411 = scalar_lea.sflag [#allocation6], 1
    %412 = vsyncpa %s411, 1
    %413 = vsyncpa [#allocation4], 1
    %s414 = scalar_lea.sflag [#allocation4], 1
    %415 = vsyncpa %s414, 1

</llo_original>
